<compile_context>
chip_gen: v5e
topology: v5e:2x2
jax: 0.10.0
libtpu: 0.0.40
codegen_flags: <defaults>
</compile_context>

<pallas_src>
import math
import functools

import jax
import jax.numpy as jnp
from jax import lax
from jax.experimental import pallas as pl
from jax.experimental.pallas import tpu as pltpu


# ----------------------------------------------------------------------------
# small helpers
# ----------------------------------------------------------------------------
def _round_up(x, m):
    return ((x + m - 1) // m) * m


def _pad_axis(x, axis, target):
    pad = target - x.shape[axis]
    if pad <= 0:
        return x
    cfg = [(0, 0)] * x.ndim
    cfg[axis] = (0, pad)
    return jnp.pad(x, cfg)


# ----------------------------------------------------------------------------
# Kernel 1: fused ScaledDotProductAttention + Sparse_attention(top_k)
#   q: (bh_tile, len_q, dk_pad)   k,v: (bh_tile, lk_pad, dk_pad / dv_pad)
#   outputs: out (bh_tile, len_q, dv_pad), attn (bh_tile, len_q, lk_pad)
# ----------------------------------------------------------------------------
def _sdpa_sparse_kernel(q_ref, k_ref, v_ref, o_ref, attn_ref, *,
                        inv_temperature, len_k, top_k, apply_sparse, eps):
    q = q_ref[...]
    k = k_ref[...]
    v = v_ref[...]

    # scores = q @ k^T / temperature ; contraction on the (padded) feature dim,
    # no explicit transpose of k (perf review #4).
    scores = jnp.einsum("bqd,bkd->bqk", q, k,
                        preferred_element_type=jnp.float32)
    scores = scores * inv_temperature

    # Mask padded key columns before the softmax (perf review #2).
    col = lax.broadcasted_iota(jnp.int32, scores.shape, dimension=2)
    scores = jnp.where(col < len_k, scores, -1e30)

    # softmax over keys (f32), EUP reciprocal (perf review #5).
    m = jnp.max(scores, axis=-1, keepdims=True)
    p = jnp.exp(scores - m)
    denom = jnp.sum(p, axis=-1, keepdims=True)
    attn = p * pl.reciprocal(denom, approx=True)

    if apply_sparse:
        # Sparse_attention: delta = top_k-th largest value + eps, clamp, renorm.
        # top_k is small and static -> unrolled max-extraction (VPU only).
        work = attn
        for _ in range(top_k - 1):
            row_max = jnp.max(work, axis=-1, keepdims=True)
            work = jnp.where(work >= row_max, -1.0, work)
        delta = jnp.max(work, axis=-1, keepdims=True) + eps
        attn_w = jnp.maximum(attn - delta, 0.0)
        wsum = jnp.sum(attn_w, axis=-1, keepdims=True) + eps
        attn = attn_w * pl.reciprocal(wsum, approx=True)

    attn_ref[...] = attn.astype(attn_ref.dtype)

    out = jnp.einsum("bqk,bkd->bqd", attn.astype(v.dtype), v,
                     preferred_element_type=jnp.float32)
    o_ref[...] = out.astype(o_ref.dtype)


# ----------------------------------------------------------------------------
# Kernel 2: fused output head  out = sigmoid(x@Wg + bg) * tanh(x@Wf + bf)
# (residual=True branch; residual=False returns fc(x)).  Rows = sz_b*len_q.
# ----------------------------------------------------------------------------
def _gated_head_kernel(x_ref, wf_ref, bf_ref, wg_ref, bg_ref, o_ref, *,
                       residual):
    x = x_ref[...]
    fc = jnp.dot(x, wf_ref[...], preferred_element_type=jnp.float32)
    fc = fc + bf_ref[...]
    if residual:
        gl = jnp.dot(x, wg_ref[...], preferred_element_type=jnp.float32)
        gl = gl + bg_ref[...]
        gate = 0.5 * (jnp.tanh(0.5 * gl) + 1.0)     # sigmoid via EUP tanh
        out = gate * jnp.tanh(fc)
    else:
        out = fc
    o_ref[...] = out.astype(o_ref.dtype)


def _gated_output_head(x, w_fc, b_fc, w_gate, b_gate, *, residual, use_bf16):
    M, k_in = x.shape
    n_out = w_fc.shape[1]
    kin_pad = _round_up(k_in, 128)
    n_pad = _round_up(n_out, 128)
    cdt = jnp.bfloat16 if use_bf16 else jnp.float32

    x_p = _pad_axis(x, 1, kin_pad).astype(cdt)
    wf_p = _pad_axis(_pad_axis(w_fc, 0, kin_pad), 1, n_pad).astype(cdt)
    wg_p = _pad_axis(_pad_axis(w_gate, 0, kin_pad), 1, n_pad).astype(cdt)
    bf_p = _pad_axis(b_fc.reshape(1, -1), 1, n_pad).astype(jnp.float32)
    bg_p = _pad_axis(b_gate.reshape(1, -1), 1, n_pad).astype(jnp.float32)

    # >=2 parallel row tiles when the row count allows it (perf review #1/#8).
    row_tile = M // 2 if (M % 16 == 0) else M

    kernel = functools.partial(_gated_head_kernel, residual=residual)
    out_p = pl.pallas_call(
        kernel,
        out_shape=jax.ShapeDtypeStruct((M, n_pad), jnp.float32),
        grid_spec=pltpu.PrefetchScalarGridSpec(
            num_scalar_prefetch=0,
            grid=(M // row_tile,),
            in_specs=[
                pl.BlockSpec((row_tile, kin_pad), lambda i: (i, 0)),
                pl.BlockSpec((kin_pad, n_pad), lambda i: (0, 0)),
                pl.BlockSpec((1, n_pad), lambda i: (0, 0)),
                pl.BlockSpec((kin_pad, n_pad), lambda i: (0, 0)),
                pl.BlockSpec((1, n_pad), lambda i: (0, 0)),
            ],
            out_specs=pl.BlockSpec((row_tile, n_pad), lambda i: (i, 0))),
        compiler_params=pltpu.CompilerParams(
            dimension_semantics=("parallel",)),
    )(x_p, wf_p, bf_p, wg_p, bg_p)
    return out_p[:, :n_out]


# ----------------------------------------------------------------------------
# Full MultiHeadAttention forward (inference)
# ----------------------------------------------------------------------------
def multi_head_attention_forward(q, k, v, params, *, n_head, d_k, d_v,
                                 topk, grad_sparse=False, residual=True,
                                 use_bf16=False, bh_tile=None):
    sz_b, len_q, _ = q.shape
    _, len_k, _ = k.shape
    _, len_v, _ = v.shape

    # --- GroupLinearLayer projections (per-position weight matrices). ---
    # TODO(synk): per-block batched matmuls are left to XLA einsum here; the
    # Pallas kernels cover the fused attention core and the gated output head.
    qp = jnp.einsum("bnd,ndo->bno", q, params["w_qs"])
    kp = jnp.einsum("bnd,ndo->bno", k, params["w_ks"])
    vp = jnp.einsum("bnd,ndo->bno", v, params["w_vs"])

    # --- split heads and fold them into the batch dimension. ---
    qh = qp.reshape(sz_b, len_q, n_head, d_k).transpose(2, 0, 1, 3)
    qh = qh.reshape(n_head * sz_b, len_q, d_k)
    kh = kp.reshape(sz_b, len_k, n_head, d_k).transpose(2, 0, 1, 3)
    kh = kh.reshape(n_head * sz_b, len_k, d_k)
    vh = vp.reshape(sz_b, len_v, n_head, d_v).transpose(2, 0, 1, 3)
    vh = vh.reshape(n_head * sz_b, len_v, d_v)

    compute_dtype = jnp.bfloat16 if use_bf16 else jnp.float32

    # --- zero-pad to lane/MXU-friendly sizes (perf review #2/#3). ---
    dk_pad = _round_up(d_k, 128)
    dv_pad = _round_up(d_v, 128)
    lk_pad = _round_up(len_k, 128)
    qh_p = _pad_axis(qh, 2, dk_pad).astype(compute_dtype)
    kh_p = _pad_axis(_pad_axis(kh, 2, dk_pad), 1, lk_pad).astype(compute_dtype)
    vh_p = _pad_axis(_pad_axis(vh, 2, dv_pad), 1, lk_pad).astype(compute_dtype)

    BH = n_head * sz_b
    if bh_tile is None:
        # A few fat grid steps instead of BH tiny ones; keep >=2 parallel steps
        # for v7x dual TensorCores.  Re-derive against 64 MiB VMEM for big shapes.
        bh_tile = BH // 2 if BH % 2 == 0 else BH
    assert BH % bh_tile == 0

    top_k = topk + 1                       # Sparse_attention does top_k += 1
    apply_sparse = (not grad_sparse) and (len_k > top_k)

    kernel = functools.partial(
        _sdpa_sparse_kernel,
        inv_temperature=1.0 / math.sqrt(d_k),
        len_k=len_k, top_k=top_k, apply_sparse=apply_sparse, eps=1e-7)

    out_p, attn_p = pl.pallas_call(
        kernel,
        out_shape=(jax.ShapeDtypeStruct((BH, len_q, dv_pad), jnp.float32),
                   jax.ShapeDtypeStruct((BH, len_q, lk_pad), jnp.float32)),
        grid_spec=pltpu.PrefetchScalarGridSpec(
            num_scalar_prefetch=0,
            grid=(BH // bh_tile,),
            in_specs=[
                pl.BlockSpec((bh_tile, len_q, dk_pad), lambda g: (g, 0, 0)),
                pl.BlockSpec((bh_tile, lk_pad, dk_pad), lambda g: (g, 0, 0)),
                pl.BlockSpec((bh_tile, lk_pad, dv_pad), lambda g: (g, 0, 0)),
            ],
            out_specs=[
                pl.BlockSpec((bh_tile, len_q, dv_pad), lambda g: (g, 0, 0)),
                pl.BlockSpec((bh_tile, len_q, lk_pad), lambda g: (g, 0, 0)),
            ]),
        compiler_params=pltpu.CompilerParams(
            dimension_semantics=("parallel",)),
    )(qh_p, kh_p, vh_p)

    attn = attn_p[:, :, :len_k]            # (n_head*sz_b, len_q, len_k)
    out = out_p[:, :, :d_v]

    # --- merge heads back. ---
    out = out.reshape(n_head, sz_b, len_q, d_v).transpose(1, 2, 0, 3)
    out = out.reshape(sz_b, len_q, n_head * d_v)

    # --- fused output head (dropout = identity in inference). ---
    # TODO(synk): nn.Dropout omitted (inference mode); self.ln is unused in the
    # reference forward and therefore not implemented.
    final = _gated_output_head(out.reshape(sz_b * len_q, n_head * d_v),
                               params["w_fc"], params["b_fc"],
                               params["w_gate"], params["b_gate"],
                               residual=residual, use_bf16=use_bf16)
    final = final.reshape(sz_b, len_q, -1)
    extra_loss = 0.0
    return final, attn, extra_loss


# ----------------------------------------------------------------------------
# Pure-JAX reference mirroring the PyTorch forward
# ----------------------------------------------------------------------------
def multi_head_attention_reference(q, k, v, params, *, n_head, d_k, d_v,
                                   topk, grad_sparse=False, residual=True,
                                   compute_dtype=jnp.float32):
    sz_b, len_q, _ = q.shape
    _, len_k, _ = k.shape
    _, len_v, _ = v.shape
    eps = 1e-7

    qp = jnp.einsum("bnd,ndo->bno", q, params["w_qs"])
    kp = jnp.einsum("bnd,ndo->bno", k, params["w_ks"])
    vp = jnp.einsum("bnd,ndo->bno", v, params["w_vs"])

    qh = qp.reshape(sz_b, len_q, n_head, d_k).transpose(2, 0, 1, 3).reshape(-1, len_q, d_k)
    kh = kp.reshape(sz_b, len_k, n_head, d_k).transpose(2, 0, 1, 3).reshape(-1, len_k, d_k)
    vh = vp.reshape(sz_b, len_v, n_head, d_v).transpose(2, 0, 1, 3).reshape(-1, len_v, d_v)

    attn = jnp.einsum("bqd,bkd->bqk", qh.astype(compute_dtype),
                      kh.astype(compute_dtype),
                      preferred_element_type=jnp.float32) / math.sqrt(d_k)
    attn = jax.nn.softmax(attn, axis=2)

    top_k = topk + 1
    if (not grad_sparse) and (len_k > top_k):
        flat = attn.reshape(-1, len_k)
        kth = jax.lax.top_k(flat, top_k)[0][:, -1:] + eps
        w = jnp.maximum(flat - kth, 0.0)
        w = w / (jnp.sum(w, axis=1, keepdims=True) + eps)
        attn = w.reshape(attn.shape)

    out = jnp.einsum("bqk,bkd->bqd", attn.astype(compute_dtype),
                     vh.astype(compute_dtype),
                     preferred_element_type=jnp.float32)
    out = out.reshape(n_head, sz_b, len_q, d_v).transpose(1, 2, 0, 3)
    out = out.reshape(sz_b, len_q, n_head * d_v)

    fc = jnp.dot(out.astype(compute_dtype), params["w_fc"].astype(compute_dtype),
                 preferred_element_type=jnp.float32) + params["b_fc"]
    gl = jnp.dot(out.astype(compute_dtype), params["w_gate"].astype(compute_dtype),
                 preferred_element_type=jnp.float32) + params["b_gate"]
    gate = jax.nn.sigmoid(gl)
    final = gate * jnp.tanh(fc) if residual else fc
    return final, attn, 0.0


# ----------------------------------------------------------------------------
if __name__ == "__main__":
    n_head, d_k, d_v = 4, 16, 16
    sz_b = 2
    len_q = 8            # num_blocks_read
    len_k = 8            # num_blocks_write
    d_model_read = 32
    d_model_write = 32
    d_model_out = 32
    topk = 3
    grad_sparse = False
    residual = True

    key = jax.random.PRNGKey(0)
    ks = jax.random.split(key, 10)

    q = jax.random.normal(ks[0], (sz_b, len_q, d_model_read), jnp.float32)
    k = jax.random.normal(ks[1], (sz_b, len_k, d_model_write), jnp.float32)
    v = jax.random.normal(ks[2], (sz_b, len_k, d_model_write), jnp.float32)

    params = {
        "w_qs": 0.1 * jax.random.normal(ks[3], (len_q, d_model_read, n_head * d_k), jnp.float32),
        "w_ks": 0.1 * jax.random.normal(ks[4], (len_k, d_model_write, n_head * d_k), jnp.float32),
        "w_vs": 0.1 * jax.random.normal(ks[5], (len_k, d_model_write, n_head * d_v), jnp.float32),
        "w_fc": 0.1 * jax.random.normal(ks[6], (n_head * d_v, d_model_out), jnp.float32),
        "b_fc": 0.01 * jax.random.normal(ks[7], (d_model_out,), jnp.float32),
        "w_gate": 0.1 * jax.random.normal(ks[8], (n_head * d_v, d_model_out), jnp.float32),
        "b_gate": 0.01 * jax.random.normal(ks[9], (d_model_out,), jnp.float32),
    }

    # ---- f32 path ----
    out, attn, _ = multi_head_attention_forward(
        q, k, v, params, n_head=n_head, d_k=d_k, d_v=d_v, topk=topk,
        grad_sparse=grad_sparse, residual=residual, use_bf16=False)
    out = jax.block_until_ready(out)
    attn = jax.block_until_ready(attn)

    ref_out, ref_attn, _ = multi_head_attention_reference(
        q, k, v, params, n_head=n_head, d_k=d_k, d_v=d_v, topk=topk,
        grad_sparse=grad_sparse, residual=residual, compute_dtype=jnp.float32)

    assert out.shape == (sz_b, len_q, d_model_out)
    assert attn.shape == (n_head * sz_b, len_q, len_k)
    # Tolerances loosened for pl.reciprocal(approx=True) (perf review #5).
    assert jnp.allclose(attn, ref_attn, atol=1e-2, rtol=1e-2), "attn mismatch"
    assert jnp.allclose(out, ref_out, atol=1e-2, rtol=1e-2), "output mismatch"

    # ---- bf16 MXU-input path (v6e/v7x), f32 accumulation (perf review #6) ----
    out_bf, attn_bf, _ = multi_head_attention_forward(
        q, k, v, params, n_head=n_head, d_k=d_k, d_v=d_v, topk=topk,
        grad_sparse=grad_sparse, residual=residual, use_bf16=True)
    out_bf = jax.block_until_ready(out_bf)
    ref_bf, _, _ = multi_head_attention_reference(
        q, k, v, params, n_head=n_head, d_k=d_k, d_v=d_v, topk=topk,
        grad_sparse=grad_sparse, residual=residual, compute_dtype=jnp.bfloat16)
    assert jnp.allclose(out_bf, ref_bf, atol=3e-2, rtol=3e-2), "bf16 mismatch"

    print("KERNEL_OK")
</pallas_src>

<mosaic_0001>
module attributes {stable_mosaic.version = 11 : i64} {
  func.func @_sdpa_sparse_kernel(%arg0: i32, %arg1: memref<4x8x128xf32, #tpu.memory_space<vmem>>, %arg2: memref<4x128x128xf32, #tpu.memory_space<vmem>>, %arg3: memref<4x128x128xf32, #tpu.memory_space<vmem>>, %arg4: memref<4x8x128xf32, #tpu.memory_space<vmem>>, %arg5: memref<4x8x128xf32, #tpu.memory_space<vmem>>) attributes {dimension_semantics = [#tpu.dimension_semantics<parallel>], iteration_bounds = array<i64: 2>, scalar_prefetch = 0 : i64, scratch_operands = 0 : i64, tpu.core_type = #tpu.core_type<tc>, window_params = [{transform_indices = @transform_0, window_bounds = array<i64: 4, 8, 128>}, {transform_indices = @transform_1, window_bounds = array<i64: 4, 128, 128>}, {transform_indices = @transform_2, window_bounds = array<i64: 4, 128, 128>}, {transform_indices = @transform_3, window_bounds = array<i64: 4, 8, 128>}, {transform_indices = @transform_4, window_bounds = array<i64: 4, 8, 128>}]} {
    %c0 = arith.constant 0 : index
    %c0_0 = arith.constant 0 : index
    %c0_1 = arith.constant 0 : index
    %0 = vector.load %arg1[%c0, %c0_0, %c0_1] : memref<4x8x128xf32, #tpu.memory_space<vmem>>, vector<4x8x128xf32>
    %c0_2 = arith.constant 0 : index
    %c0_3 = arith.constant 0 : index
    %c0_4 = arith.constant 0 : index
    %1 = vector.load %arg2[%c0_2, %c0_3, %c0_4] : memref<4x128x128xf32, #tpu.memory_space<vmem>>, vector<4x128x128xf32>
    %c0_5 = arith.constant 0 : index
    %c0_6 = arith.constant 0 : index
    %c0_7 = arith.constant 0 : index
    %2 = vector.load %arg3[%c0_5, %c0_6, %c0_7] : memref<4x128x128xf32, #tpu.memory_space<vmem>>, vector<4x128x128xf32>
    "tpu.trace_start"() <{level = 10 : i32, message = "bqd,bkd->bqk"}> : () -> ()
    %cst = arith.constant dense<0.000000e+00> : vector<4x8x128xf32>
    %3 = tpu.matmul %0, %1, %cst {dimension_numbers = #tpu.dot_dimension_numbers<[2], [2], [1], [1], [0, 0, 0, 1, 1, 1], [0], [0]>} : vector<4x8x128xf32>, vector<4x128x128xf32>, vector<4x8x128xf32> -> vector<4x8x128xf32>
    "tpu.trace_stop"() : () -> ()
    %cst_8 = arith.constant 2.500000e-01 : f32
    %4 = vector.broadcast %cst_8 : f32 to vector<4x8x128xf32>
    %5 = arith.mulf %3, %4 : vector<4x8x128xf32>
    %6 = tpu.iota {dimensions = array<i32: 2>} : vector<4x8x128xi32>
    %c8_i32 = arith.constant 8 : i32
    %7 = vector.broadcast %c8_i32 : i32 to vector<4x8x128xi32>
    %8 = arith.cmpi slt, %6, %7 : vector<4x8x128xi32>
    %cst_9 = arith.constant -1.000000e+30 : f32
    %9 = vector.broadcast %cst_9 : f32 to vector<4x8x128xf32>
    %10 = arith.select %8, %5, %9 : vector<4x8x128xi1>, vector<4x8x128xf32>
    %cst_10 = arith.constant dense<0xFF800000> : vector<4x8xf32>
    %11 = vector.multi_reduction <maximumf>, %10, %cst_10 [2] : vector<4x8x128xf32> to vector<4x8xf32>
    %12 = vector.shape_cast %11 : vector<4x8xf32> to vector<4x8x1xf32>
    %13 = vector.broadcast %12 : vector<4x8x1xf32> to vector<4x8x128xf32>
    %14 = arith.subf %10, %13 : vector<4x8x128xf32>
    %15 = math.exp %14 : vector<4x8x128xf32>
    %cst_11 = arith.constant dense<0.000000e+00> : vector<4x8xf32>
    %16 = vector.multi_reduction <add>, %15, %cst_11 [2] : vector<4x8x128xf32> to vector<4x8xf32>
    %17 = vector.shape_cast %16 : vector<4x8xf32> to vector<4x8x1xf32>
    %18 = tpu.reciprocal %17 {approx = true} : vector<4x8x1xf32> -> vector<4x8x1xf32>
    %19 = vector.broadcast %18 : vector<4x8x1xf32> to vector<4x8x128xf32>
    %20 = arith.mulf %15, %19 : vector<4x8x128xf32>
    %cst_12 = arith.constant dense<0xFF800000> : vector<4x8xf32>
    %21 = vector.multi_reduction <maximumf>, %20, %cst_12 [2] : vector<4x8x128xf32> to vector<4x8xf32>
    %22 = vector.shape_cast %21 : vector<4x8xf32> to vector<4x8x1xf32>
    %23 = vector.broadcast %22 : vector<4x8x1xf32> to vector<4x8x128xf32>
    %24 = arith.cmpf oge, %20, %23 : vector<4x8x128xf32>
    %cst_13 = arith.constant -1.000000e+00 : f32
    %25 = vector.broadcast %cst_13 : f32 to vector<4x8x128xf32>
    %26 = arith.select %24, %25, %20 : vector<4x8x128xi1>, vector<4x8x128xf32>
    %cst_14 = arith.constant dense<0xFF800000> : vector<4x8xf32>
    %27 = vector.multi_reduction <maximumf>, %26, %cst_14 [2] : vector<4x8x128xf32> to vector<4x8xf32>
    %28 = vector.shape_cast %27 : vector<4x8xf32> to vector<4x8x1xf32>
    %29 = vector.broadcast %28 : vector<4x8x1xf32> to vector<4x8x128xf32>
    %30 = arith.cmpf oge, %26, %29 : vector<4x8x128xf32>
    %cst_15 = arith.constant -1.000000e+00 : f32
    %31 = vector.broadcast %cst_15 : f32 to vector<4x8x128xf32>
    %32 = arith.select %30, %31, %26 : vector<4x8x128xi1>, vector<4x8x128xf32>
    %cst_16 = arith.constant dense<0xFF800000> : vector<4x8xf32>
    %33 = vector.multi_reduction <maximumf>, %32, %cst_16 [2] : vector<4x8x128xf32> to vector<4x8xf32>
    %34 = vector.shape_cast %33 : vector<4x8xf32> to vector<4x8x1xf32>
    %35 = vector.broadcast %34 : vector<4x8x1xf32> to vector<4x8x128xf32>
    %36 = arith.cmpf oge, %32, %35 : vector<4x8x128xf32>
    %cst_17 = arith.constant -1.000000e+00 : f32
    %37 = vector.broadcast %cst_17 : f32 to vector<4x8x128xf32>
    %38 = arith.select %36, %37, %32 : vector<4x8x128xi1>, vector<4x8x128xf32>
    %cst_18 = arith.constant dense<0xFF800000> : vector<4x8xf32>
    %39 = vector.multi_reduction <maximumf>, %38, %cst_18 [2] : vector<4x8x128xf32> to vector<4x8xf32>
    %40 = vector.shape_cast %39 : vector<4x8xf32> to vector<4x8x1xf32>
    %cst_19 = arith.constant 1.000000e-07 : f32
    %41 = vector.broadcast %cst_19 : f32 to vector<4x8x1xf32>
    %42 = arith.addf %40, %41 : vector<4x8x1xf32>
    %43 = vector.broadcast %42 : vector<4x8x1xf32> to vector<4x8x128xf32>
    %44 = arith.subf %20, %43 : vector<4x8x128xf32>
    %cst_20 = arith.constant 0.000000e+00 : f32
    %45 = vector.broadcast %cst_20 : f32 to vector<4x8x128xf32>
    %46 = arith.maximumf %44, %45 : vector<4x8x128xf32>
    %cst_21 = arith.constant dense<0.000000e+00> : vector<4x8xf32>
    %47 = vector.multi_reduction <add>, %46, %cst_21 [2] : vector<4x8x128xf32> to vector<4x8xf32>
    %48 = vector.shape_cast %47 : vector<4x8xf32> to vector<4x8x1xf32>
    %cst_22 = arith.constant 1.000000e-07 : f32
    %49 = vector.broadcast %cst_22 : f32 to vector<4x8x1xf32>
    %50 = arith.addf %48, %49 : vector<4x8x1xf32>
    %51 = tpu.reciprocal %50 {approx = true} : vector<4x8x1xf32> -> vector<4x8x1xf32>
    %52 = vector.broadcast %51 : vector<4x8x1xf32> to vector<4x8x128xf32>
    %53 = arith.mulf %46, %52 : vector<4x8x128xf32>
    %c0_23 = arith.constant 0 : index
    %c0_24 = arith.constant 0 : index
    %c0_25 = arith.constant 0 : index
    %54 = vector.load %arg5[%c0_23, %c0_24, %c0_25] : memref<4x8x128xf32, #tpu.memory_space<vmem>>, vector<4x8x128xf32>
    tpu.vector_store %arg5[%c0_23, %c0_24, %c0_25], %53 {strides = array<i32>} : memref<4x8x128xf32, #tpu.memory_space<vmem>>, vector<4x8x128xf32>,
    "tpu.trace_start"() <{level = 10 : i32, message = "bqk,bkd->bqd"}> : () -> ()
    %cst_26 = arith.constant dense<0.000000e+00> : vector<4x8x128xf32>
    %55 = tpu.matmul %53, %2, %cst_26 {dimension_numbers = #tpu.dot_dimension_numbers<[2], [1], [1], [2], [0, 0, 0, 1, 1, 2], [0], [0]>} : vector<4x8x128xf32>, vector<4x128x128xf32>, vector<4x8x128xf32> -> vector<4x8x128xf32>
    "tpu.trace_stop"() : () -> ()
    %c0_27 = arith.constant 0 : index
    %c0_28 = arith.constant 0 : index
    %c0_29 = arith.constant 0 : index
    %56 = vector.load %arg4[%c0_27, %c0_28, %c0_29] : memref<4x8x128xf32, #tpu.memory_space<vmem>>, vector<4x8x128xf32>
    tpu.vector_store %arg4[%c0_27, %c0_28, %c0_29], %55 {strides = array<i32>} : memref<4x8x128xf32, #tpu.memory_space<vmem>>, vector<4x8x128xf32>,
    return
  }
  func.func @transform_0(%arg0: i32) -> (i32, i32, i32) {
    %c0_i32 = arith.constant 0 : i32
    %c0_i32_0 = arith.constant 0 : i32
    %c0_i32_1 = arith.constant 0 : i32
    return %arg0, %c0_i32, %c0_i32_0 : i32, i32, i32
  }
  func.func @transform_1(%arg0: i32) -> (i32, i32, i32) {
    %c0_i32 = arith.constant 0 : i32
    %c0_i32_0 = arith.constant 0 : i32
    %c0_i32_1 = arith.constant 0 : i32
    return %arg0, %c0_i32, %c0_i32_0 : i32, i32, i32
  }
  func.func @transform_2(%arg0: i32) -> (i32, i32, i32) {
    %c0_i32 = arith.constant 0 : i32
    %c0_i32_0 = arith.constant 0 : i32
    %c0_i32_1 = arith.constant 0 : i32
    return %arg0, %c0_i32, %c0_i32_0 : i32, i32, i32
  }
  func.func @transform_3(%arg0: i32) -> (i32, i32, i32) {
    %c0_i32 = arith.constant 0 : i32
    %c0_i32_0 = arith.constant 0 : i32
    %c0_i32_1 = arith.constant 0 : i32
    return %arg0, %c0_i32, %c0_i32_0 : i32, i32, i32
  }
  func.func @transform_4(%arg0: i32) -> (i32, i32, i32) {
    %c0_i32 = arith.constant 0 : i32
    %c0_i32_0 = arith.constant 0 : i32
    %c0_i32_1 = arith.constant 0 : i32
    return %arg0, %c0_i32, %c0_i32_0 : i32, i32, i32
  }
}

</mosaic_0001>

<llo_original>
// kernel: tpu_custom_call.1
$region0: #{tpu_custom_call.1}
  #allocation0 [shape = 'u32[]', space=smem, size = 0x4, offset = 0x4, fixed_abs, tag = 'smem constant byte address 0x4 - core index']
  #allocation1 [shape = 'u32[72,128]{1,0:T(1,128)}', space=vmem, size = 0x9000, scoped, tag = 'internal scratch']
  %s0 = inlined_call_operand.hbm [shape: f32[8,8,128], index: 0, kind: input, shape index: {}]
  %s1 = inlined_call_operand.hbm [shape: f32[8,128,128], index: 1, kind: input, shape index: {}]
  %s2 = inlined_call_operand.hbm [shape: f32[8,128,128], index: 2, kind: input, shape index: {}]
  %s3 = inlined_call_operand.hbm [shape: f32[8,8,128], index: 3, kind: output, shape index: {0}]
  %s4 = inlined_call_operand.hbm [shape: f32[8,8,128], index: 4, kind: output, shape index: {1}]
  %5 = xla_tuple %s3, %s4
  %s6 = sld [smem:[#allocation0]]
  $region65: #{tpu_custom_call.1} parent=0
    _
  %s8 = ssub.s32 1, %s6
  %s9 = scalar_select 0, %s8, %s6
  $region1: #{tpu_custom_call.1} parent=0
    #allocation2 [shape = 'u8[32768]{0}', space=vmem, size = 0x8000, scoped, tag = 'input window, operand 0']
    #allocation3 [shape = 's32[2]{0}', space=sflag, size = 0x8, scoped, tag = 'scoped memory for tpu_custom_call.1']
    #allocation4 [shape = 's32[2]{0}', space=sflag, size = 0x8, scoped, tag = 'scoped memory for tpu_custom_call.1']
    #allocation5 [shape = 'u8[524288]{0}', space=vmem, size = 0x80000, scoped, tag = 'input window, operand 1']
    #allocation6 [shape = 's32[2]{0}', space=sflag, size = 0x8, scoped, tag = 'scoped memory for tpu_custom_call.1']
    #allocation7 [shape = 'u8[524288]{0}', space=vmem, size = 0x80000, scoped, tag = 'input window, operand 2']
    #allocation8 [shape = 'u8[32768]{0}', space=vmem, size = 0x8000, scoped, tag = 'output window, operand 0']
    #allocation9 [shape = 'u8[32768]{0}', space=vmem, size = 0x8000, scoped, tag = 'output window, operand 1']
    #allocation10 [shape = 's32[2]{0}', space=sflag, size = 0x8, scoped, tag = 'scoped memory for tpu_custom_call.1']
    %10 = vsyncpa [#allocation3], 0
    %s11 = scalar_lea.sflag [#allocation3], 1
    %12 = vsyncpa %s11, 0
    %13 = vsyncpa [#allocation6], 0
    %s14 = scalar_lea.sflag [#allocation6], 1
    %15 = vsyncpa %s14, 0
    %16 = vsyncpa [#allocation4], 0
    %s17 = scalar_lea.sflag [#allocation4], 1
    %18 = vsyncpa %s17, 0
    %19 = vsyncpa [#allocation10], 0
    %s20 = scalar_lea.sflag [#allocation10], 1
    %21 = vsyncpa %s20, 0
    loop: start=0, step=1, limit=4
    $region2: #{tpu_custom_call.1} parent=1 // loop_pre_header
      _
    $region3: #{tpu_custom_call.1} parent=1 // loop_header
      %s23 = sphi 0, %s27
      %p24 = scmp.ge.s32.totalorder %s23, 4
      %s33 = sphi 0, %s35
      %s36 = sphi 0, %s33
      %s37 = sphi 0, %s36
      %s53 = sphi 0, %s37
      %s59 = sphi 0, %s61
      %s62 = sphi 0, %s59
      %s63 = sphi 0, %s62
      %s79 = sphi 0, %s63
      %s85 = sphi 0, %s87
      %s88 = sphi 0, %s85
      %s89 = sphi 0, %s88
      %s105 = sphi 0, %s89
      %s111 = sphi 0, %s113
      %s114 = sphi 0, %s111
      %s115 = sphi 0, %s114
      %s131 = sphi 0, %s115
      %s137 = sphi 0, %s139
      %s140 = sphi 0, %s137
      %s141 = sphi 0, %s140
      %s157 = sphi 0, %s141
    $region4: #{tpu_custom_call.1} parent=1 // loop_header_branch
      %26 = sbr.rel (%p24) target = $region8
    $region5: #{tpu_custom_call.1} parent=1 // loop_body
      %s28 = ssub.s32 %s23, 1
      %s29 = ssub.s32 %s23, 2
      %s30 = sadd.s32 %s23, 1
      %s31 = ssub.s32 %s23, %s30
      %p32 = scmp.eq.s32.totalorder %s31, 0
      %s34 = sadd.s32 %s33, 1
      %s35 = scalar_select %p32, %s33, %s34
      %p38 = pneg %p32
      %p39 = scmp.eq.s32.totalorder %s23, 1
      %p40 = por %p38, %p39
      %p41 = scmp.ne.s32.totalorder %s33, %s36
      %p42 = scmp.eq.s32.totalorder %s23, 0
      %p43 = por %p41, %p42
      %p44 = scmp.ne.s32.totalorder %s33, %s36
      %p45 = scmp.eq.s32.totalorder %s28, 1
      %p46 = por %p44, %p45
      %p47 = scmp.ne.s32.totalorder %s36, %s37
      %p48 = scmp.eq.s32.totalorder %s28, 0
      %p49 = por %p47, %p48
      %p50 = scmp.ne.s32.totalorder %s36, %s37
      %p51 = scmp.eq.s32.totalorder %s29, 1
      %p52 = por %p50, %p51
      %p54 = scmp.ne.s32.totalorder %s37, %s53
      %p55 = scmp.eq.s32.totalorder %s29, 0
      %p56 = por %p54, %p55
      %s57 = ssub.s32 %s23, %s30
      %p58 = scmp.eq.s32.totalorder %s57, 0
      %s60 = sadd.s32 %s59, 1
      %s61 = scalar_select %p58, %s59, %s60
      %p64 = pneg %p58
      %p65 = scmp.eq.s32.totalorder %s23, 1
      %p66 = por %p64, %p65
      %p67 = scmp.ne.s32.totalorder %s59, %s62
      %p68 = scmp.eq.s32.totalorder %s23, 0
      %p69 = por %p67, %p68
      %p70 = scmp.ne.s32.totalorder %s59, %s62
      %p71 = scmp.eq.s32.totalorder %s28, 1
      %p72 = por %p70, %p71
      %p73 = scmp.ne.s32.totalorder %s62, %s63
      %p74 = scmp.eq.s32.totalorder %s28, 0
      %p75 = por %p73, %p74
      %p76 = scmp.ne.s32.totalorder %s62, %s63
      %p77 = scmp.eq.s32.totalorder %s29, 1
      %p78 = por %p76, %p77
      %p80 = scmp.ne.s32.totalorder %s63, %s79
      %p81 = scmp.eq.s32.totalorder %s29, 0
      %p82 = por %p80, %p81
      %s83 = ssub.s32 %s23, %s30
      %p84 = scmp.eq.s32.totalorder %s83, 0
      %s86 = sadd.s32 %s85, 1
      %s87 = scalar_select %p84, %s85, %s86
      %p90 = pneg %p84
      %p91 = scmp.eq.s32.totalorder %s23, 1
      %p92 = por %p90, %p91
      %p93 = scmp.ne.s32.totalorder %s85, %s88
      %p94 = scmp.eq.s32.totalorder %s23, 0
      %p95 = por %p93, %p94
      %p96 = scmp.ne.s32.totalorder %s85, %s88
      %p97 = scmp.eq.s32.totalorder %s28, 1
      %p98 = por %p96, %p97
      %p99 = scmp.ne.s32.totalorder %s88, %s89
      %p100 = scmp.eq.s32.totalorder %s28, 0
      %p101 = por %p99, %p100
      %p102 = scmp.ne.s32.totalorder %s88, %s89
      %p103 = scmp.eq.s32.totalorder %s29, 1
      %p104 = por %p102, %p103
      %p106 = scmp.ne.s32.totalorder %s89, %s105
      %p107 = scmp.eq.s32.totalorder %s29, 0
      %p108 = por %p106, %p107
      %s109 = ssub.s32 %s23, %s30
      %p110 = scmp.eq.s32.totalorder %s109, 0
      %s112 = sadd.s32 %s111, 1
      %s113 = scalar_select %p110, %s111, %s112
      %p116 = pneg %p110
      %p117 = scmp.eq.s32.totalorder %s23, 1
      %p118 = por %p116, %p117
      %p119 = scmp.ne.s32.totalorder %s111, %s114
      %p120 = scmp.eq.s32.totalorder %s23, 0
      %p121 = por %p119, %p120
      %p122 = scmp.ne.s32.totalorder %s111, %s114
      %p123 = scmp.eq.s32.totalorder %s28, 1
      %p124 = por %p122, %p123
      %p125 = scmp.ne.s32.totalorder %s114, %s115
      %p126 = scmp.eq.s32.totalorder %s28, 0
      %p127 = por %p125, %p126
      %p128 = scmp.ne.s32.totalorder %s114, %s115
      %p129 = scmp.eq.s32.totalorder %s29, 1
      %p130 = por %p128, %p129
      %p132 = scmp.ne.s32.totalorder %s115, %s131
      %p133 = scmp.eq.s32.totalorder %s29, 0
      %p134 = por %p132, %p133
      %s135 = ssub.s32 %s23, %s30
      %p136 = scmp.eq.s32.totalorder %s135, 0
      %s138 = sadd.s32 %s137, 1
      %s139 = scalar_select %p136, %s137, %s138
      %p142 = pneg %p136
      %p143 = scmp.eq.s32.totalorder %s23, 1
      %p144 = por %p142, %p143
      %p145 = scmp.ne.s32.totalorder %s137, %s140
      %p146 = scmp.eq.s32.totalorder %s23, 0
      %p147 = por %p145, %p146
      %p148 = scmp.ne.s32.totalorder %s137, %s140
      %p149 = scmp.eq.s32.totalorder %s28, 1
      %p150 = por %p148, %p149
      %p151 = scmp.ne.s32.totalorder %s140, %s141
      %p152 = scmp.eq.s32.totalorder %s28, 0
      %p153 = por %p151, %p152
      %p154 = scmp.ne.s32.totalorder %s140, %s141
      %p155 = scmp.eq.s32.totalorder %s29, 1
      %p156 = por %p154, %p155
      %p158 = scmp.ne.s32.totalorder %s141, %s157
      %p159 = scmp.eq.s32.totalorder %s29, 0
      %p160 = por %p158, %p159
      %p161 = scmp.le.s32.totalorder 1, %s23
      %p162 = scmp.lt.s32.totalorder %s23, 3
      %p163 = pnand %p161, %p162
      %p164 = pneg %p163
      // Predicated region
      $region9: #{tpu_custom_call.1} parent=5 // pred_check
        _
      $region10: #{tpu_custom_call.1} parent=5 // pred_check_branch
        %166 = sbr.rel (%p163) target = $region12
      $region11: #{tpu_custom_call.1} parent=5 // pred_region
        %s167 = ssub.s32 %s23, 1
      $region12: #{tpu_custom_call.1} parent=5 // pred_fallthru
        _
      %p168 = scmp.lt.s32.totalorder %s23, 2
      // Predicated region
      $region13: #{tpu_custom_call.1} parent=5 // pred_check
        %p169 = pneg %p168
      $region14: #{tpu_custom_call.1} parent=5 // pred_check_branch
        %171 = sbr.rel (%p169) target = $region16
      $region15: #{tpu_custom_call.1} parent=5 // pred_region
        // Predicated region
        $region17: #{tpu_custom_call.1} parent=15 // pred_check
          %p172 = pneg %p43
        $region18: #{tpu_custom_call.1} parent=15 // pred_check_branch
          %174 = sbr.rel (%p172) target = $region20
        $region19: #{tpu_custom_call.1} parent=15 // pred_region
          %s175 = sand.u32 %s33, 1
          %s176 = scalar_lea.sflag [#allocation3], %s175
          %s177 = sand.u32 %s33, 1
          %s178 = smul.addr %s177, 32
          %s179 = scalar_lea.vmem [#allocation2], %s178
          %s180 = smul.u32 4, %s23
          %182 = vsyncadd %s176, 0
          %s183 = smul.addr %s180, 8
          %s184 = scalar_lea.hbm %s0, %s183
          %s185 = sshll.u32 %s184, 4
          %s186 = int_to_ptr.hbm [resolvable:$true] %s185
          %s187 = sshll.u32 %s179, 4
          %s188 = int_to_ptr.vmem [resolvable:$true] %s187
          %193 = dma.hbm_to_vmem [thread:$0]  %s186, 512, %s188, %s176, 128, 128, 8
        $region20: #{tpu_custom_call.1} parent=15 // pred_fallthru
          _
        // Predicated region
        $region21: #{tpu_custom_call.1} parent=15 // pred_check
          %p194 = pneg %p69
        $region22: #{tpu_custom_call.1} parent=15 // pred_check_branch
          %196 = sbr.rel (%p194) target = $region24
        $region23: #{tpu_custom_call.1} parent=15 // pred_region
          %s197 = sand.u32 %s23, 1
          %s198 = scalar_lea.sflag [#allocation6], %s197
          %s199 = sand.u32 %s59, 1
          %s200 = smul.addr %s199, 512
          %s201 = scalar_lea.vmem [#allocation5], %s200
          %s202 = smul.u32 4, %s23
          %204 = vsyncadd %s198, 0
          %s205 = smul.addr %s202, 16
          %s206 = smul.addr %s205, 8
          %s207 = scalar_lea.hbm %s1, %s206
          %s208 = sshll.u32 %s207, 4
          %s209 = int_to_ptr.hbm [resolvable:$true] %s208
          %s210 = sshll.u32 %s201, 4
          %s211 = int_to_ptr.vmem [resolvable:$true] %s210
          %216 = dma.hbm_to_vmem [thread:$0]  %s209, 8192, %s211, %s198, 128, 128, 8
        $region24: #{tpu_custom_call.1} parent=15 // pred_fallthru
          _
        // Predicated region
        $region25: #{tpu_custom_call.1} parent=15 // pred_check
          %p217 = pneg %p95
        $region26: #{tpu_custom_call.1} parent=15 // pred_check_branch
          %219 = sbr.rel (%p217) target = $region28
        $region27: #{tpu_custom_call.1} parent=15 // pred_region
          %s220 = sand.u32 %s23, 1
          %s221 = scalar_lea.sflag [#allocation6], %s220
          %s222 = sand.u32 %s85, 1
          %s223 = smul.addr %s222, 512
          %s224 = scalar_lea.vmem [#allocation7], %s223
          %s225 = smul.u32 4, %s23
          %227 = vsyncadd %s221, 0
          %s228 = smul.addr %s225, 16
          %s229 = smul.addr %s228, 8
          %s230 = scalar_lea.hbm %s2, %s229
          %s231 = sshll.u32 %s230, 4
          %s232 = int_to_ptr.hbm [resolvable:$true] %s231
          %s233 = sshll.u32 %s224, 4
          %s234 = int_to_ptr.vmem [resolvable:$true] %s233
          %239 = dma.hbm_to_vmem [thread:$0]  %s232, 8192, %s234, %s221, 128, 128, 8
        $region28: #{tpu_custom_call.1} parent=15 // pred_fallthru
          _
      $region16: #{tpu_custom_call.1} parent=5 // pred_fallthru
        _
      %p240 = scmp.le.s32.totalorder 1, %s23
      %p241 = scmp.lt.s32.totalorder %s23, 3
      %p242 = pnand %p240, %p241
      %p243 = pneg %p242
      // Predicated region
      $region29: #{tpu_custom_call.1} parent=5 // pred_check
        _
      $region30: #{tpu_custom_call.1} parent=5 // pred_check_branch
        %245 = sbr.rel (%p242) target = $region32
      $region31: #{tpu_custom_call.1} parent=5 // pred_region
        %s246 = ssub.s32 %s23, 1
        %s247 = sand.u32 %s36, 1
        %s248 = scalar_lea.sflag [#allocation3], %s247
        %s249 = sand.u32 %s36, 1
        %s250 = smul.addr %s249, 32
        %s251 = scalar_lea.vmem [#allocation2], %s250
        // Predicated region
        $region33: #{tpu_custom_call.1} parent=31 // pred_check
          %p252 = pneg %p49
        $region34: #{tpu_custom_call.1} parent=31 // pred_check_branch
          %254 = sbr.rel (%p252) target = $region36
        $region35: #{tpu_custom_call.1} parent=31 // pred_region
          %256 = dma.done %s248, 512
        $region36: #{tpu_custom_call.1} parent=31 // pred_fallthru
          _
        %s257 = sand.u32 %s28, 1
        %s258 = scalar_lea.sflag [#allocation6], %s257
        %s259 = sand.u32 %s62, 1
        %s260 = smul.addr %s259, 512
        %s261 = scalar_lea.vmem [#allocation5], %s260
        // Predicated region
        $region37: #{tpu_custom_call.1} parent=31 // pred_check
          %p262 = pneg %p75
        $region38: #{tpu_custom_call.1} parent=31 // pred_check_branch
          %264 = sbr.rel (%p262) target = $region40
        $region39: #{tpu_custom_call.1} parent=31 // pred_region
          %266 = dma.done %s258, 8192
        $region40: #{tpu_custom_call.1} parent=31 // pred_fallthru
          _
        %s267 = sand.u32 %s28, 1
        %s268 = scalar_lea.sflag [#allocation6], %s267
        %s269 = sand.u32 %s88, 1
        %s270 = smul.addr %s269, 512
        %s271 = scalar_lea.vmem [#allocation7], %s270
        // Predicated region
        $region41: #{tpu_custom_call.1} parent=31 // pred_check
          %p272 = pneg %p101
        $region42: #{tpu_custom_call.1} parent=31 // pred_check_branch
          %274 = sbr.rel (%p272) target = $region44
        $region43: #{tpu_custom_call.1} parent=31 // pred_region
          %276 = dma.done %s268, 8192
        $region44: #{tpu_custom_call.1} parent=31 // pred_fallthru
          _
        %s277 = sand.u32 %s36, 1
        %s278 = scalar_lea.sflag [#allocation3], %s277
        %s279 = sand.u32 %s36, 1
        %s280 = smul.addr %s279, 32
        %s281 = scalar_lea.vmem [#allocation2], %s280
        %p282 = pneg %p49
        %p283 = pneg %p46
        %s284 = sand.u32 %s28, 1
        %s285 = scalar_lea.sflag [#allocation6], %s284
        %s286 = sand.u32 %s62, 1
        %s287 = smul.addr %s286, 512
        %s288 = scalar_lea.vmem [#allocation5], %s287
        %p289 = pneg %p75
        %p290 = pneg %p72
        %s291 = sand.u32 %s28, 1
        %s292 = scalar_lea.sflag [#allocation6], %s291
        %s293 = sand.u32 %s88, 1
        %s294 = smul.addr %s293, 512
        %s295 = scalar_lea.vmem [#allocation7], %s294
        %p296 = pneg %p101
        %p297 = pneg %p98
        %p298 = pneg %p127
        %p299 = pneg %p124
        %s300 = sand.u32 %s114, 1
        %s301 = scalar_lea.sflag [#allocation4], %s300
        %s302 = sand.u32 %s114, 1
        %s303 = smul.addr %s302, 32
        %s304 = scalar_lea.vmem [#allocation8], %s303
        %p305 = pneg %p153
        %p306 = pneg %p150
        %s307 = sand.u32 %s140, 1
        %s308 = scalar_lea.sflag [#allocation10], %s307
        %s309 = sand.u32 %s140, 1
        %s310 = smul.addr %s309, 32
        %s311 = scalar_lea.vmem [#allocation9], %s310
        %s312 = smul.u32 4, %s28
        %s313 = smul.u32 4, %s28
        %s314 = smul.u32 4, %s28
        %s315 = smul.u32 4, %s28
        %s316 = smul.u32 4, %s28
        %v317 = vld [vmem:[%s251] sm:$0xff]
        %v318 = vld [vmem:[%s251 + $0x8] sm:$0xff]
        %v319 = vld [vmem:[%s251 + $0x10] sm:$0xff]
        %v320 = vld [vmem:[%s251 + $0x18] sm:$0xff]
        %v321 = vld [vmem:[%s261] sm:$0xff]
        %v322 = vld [vmem:[%s261 + $0x8] sm:$0xff]
        %v323 = vld [vmem:[%s261 + $0x10] sm:$0xff]
        %v324 = vld [vmem:[%s261 + $0x18] sm:$0xff]
        %v325 = vld [vmem:[%s261 + $0x20] sm:$0xff]
        %v326 = vld [vmem:[%s261 + $0x28] sm:$0xff]
        %v327 = vld [vmem:[%s261 + $0x30] sm:$0xff]
        %v328 = vld [vmem:[%s261 + $0x38] sm:$0xff]
        %v329 = vld [vmem:[%s261 + $0x40] sm:$0xff]
        %v330 = vld [vmem:[%s261 + $0x48] sm:$0xff]
        %v331 = vld [vmem:[%s261 + $0x50] sm:$0xff]
        %v332 = vld [vmem:[%s261 + $0x58] sm:$0xff]
        %v333 = vld [vmem:[%s261 + $0x60] sm:$0xff]
        %v334 = vld [vmem:[%s261 + $0x68] sm:$0xff]
        %v335 = vld [vmem:[%s261 + $0x70] sm:$0xff]
        %v336 = vld [vmem:[%s261 + $0x78] sm:$0xff]
        %v337 = vld [vmem:[%s261 + $0x80] sm:$0xff]
        %v338 = vld [vmem:[%s261 + $0x88] sm:$0xff]
        %v339 = vld [vmem:[%s261 + $0x90] sm:$0xff]
        %v340 = vld [vmem:[%s261 + $0x98] sm:$0xff]
        %v341 = vld [vmem:[%s261 + $0xa0] sm:$0xff]
        %v342 = vld [vmem:[%s261 + $0xa8] sm:$0xff]
        %v343 = vld [vmem:[%s261 + $0xb0] sm:$0xff]
        %v344 = vld [vmem:[%s261 + $0xb8] sm:$0xff]
        %v345 = vld [vmem:[%s261 + $0xc0] sm:$0xff]
        %v346 = vld [vmem:[%s261 + $0xc8] sm:$0xff]
        %v347 = vld [vmem:[%s261 + $0xd0] sm:$0xff]
        %v348 = vld [vmem:[%s261 + $0xd8] sm:$0xff]
        %v349 = vld [vmem:[%s261 + $0xe0] sm:$0xff]
        %v350 = vld [vmem:[%s261 + $0xe8] sm:$0xff]
        %v351 = vld [vmem:[%s261 + $0xf0] sm:$0xff]
        %v352 = vld [vmem:[%s261 + $0xf8] sm:$0xff]
        %v353 = vld [vmem:[%s261 + $0x100] sm:$0xff]
        %v354 = vld [vmem:[%s261 + $0x108] sm:$0xff]
        %v355 = vld [vmem:[%s261 + $0x110] sm:$0xff]
        %v356 = vld [vmem:[%s261 + $0x118] sm:$0xff]
        %v357 = vld [vmem:[%s261 + $0x120] sm:$0xff]
        %v358 = vld [vmem:[%s261 + $0x128] sm:$0xff]
        %v359 = vld [vmem:[%s261 + $0x130] sm:$0xff]
        %v360 = vld [vmem:[%s261 + $0x138] sm:$0xff]
        %v361 = vld [vmem:[%s261 + $0x140] sm:$0xff]
        %v362 = vld [vmem:[%s261 + $0x148] sm:$0xff]
        %v363 = vld [vmem:[%s261 + $0x150] sm:$0xff]
        %v364 = vld [vmem:[%s261 + $0x158] sm:$0xff]
        %v365 = vld [vmem:[%s261 + $0x160] sm:$0xff]
        %v366 = vld [vmem:[%s261 + $0x168] sm:$0xff]
        %v367 = vld [vmem:[%s261 + $0x170] sm:$0xff]
        %v368 = vld [vmem:[%s261 + $0x178] sm:$0xff]
        %v369 = vld [vmem:[%s261 + $0x180] sm:$0xff]
        %v370 = vld [vmem:[%s261 + $0x188] sm:$0xff]
        %v371 = vld [vmem:[%s261 + $0x190] sm:$0xff]
        %v372 = vld [vmem:[%s261 + $0x198] sm:$0xff]
        %v373 = vld [vmem:[%s261 + $0x1a0] sm:$0xff]
        %v374 = vld [vmem:[%s261 + $0x1a8] sm:$0xff]
        %v375 = vld [vmem:[%s261 + $0x1b0] sm:$0xff]
        %v376 = vld [vmem:[%s261 + $0x1b8] sm:$0xff]
        %v377 = vld [vmem:[%s261 + $0x1c0] sm:$0xff]
        %v378 = vld [vmem:[%s261 + $0x1c8] sm:$0xff]
        %v379 = vld [vmem:[%s261 + $0x1d0] sm:$0xff]
        %v380 = vld [vmem:[%s261 + $0x1d8] sm:$0xff]
        %v381 = vld [vmem:[%s261 + $0x1e0] sm:$0xff]
        %v382 = vld [vmem:[%s261 + $0x1e8] sm:$0xff]
        %v383 = vld [vmem:[%s261 + $0x1f0] sm:$0xff]
        %v384 = vld [vmem:[%s261 + $0x1f8] sm:$0xff]
        %v385 = vld [vmem:[%s271] sm:$0xff]
        %v386 = vld [vmem:[%s271 + $0x8] sm:$0xff]
        %v387 = vld [vmem:[%s271 + $0x10] sm:$0xff]
        %v388 = vld [vmem:[%s271 + $0x18] sm:$0xff]
        %v389 = vld [vmem:[%s271 + $0x20] sm:$0xff]
        %v390 = vld [vmem:[%s271 + $0x28] sm:$0xff]
        %v391 = vld [vmem:[%s271 + $0x30] sm:$0xff]
        %v392 = vld [vmem:[%s271 + $0x38] sm:$0xff]
        %v393 = vld [vmem:[%s271 + $0x40] sm:$0xff]
        %v394 = vld [vmem:[%s271 + $0x48] sm:$0xff]
        %v395 = vld [vmem:[%s271 + $0x50] sm:$0xff]
        %v396 = vld [vmem:[%s271 + $0x58] sm:$0xff]
        %v397 = vld [vmem:[%s271 + $0x60] sm:$0xff]
        %v398 = vld [vmem:[%s271 + $0x68] sm:$0xff]
        %v399 = vld [vmem:[%s271 + $0x70] sm:$0xff]
        %v400 = vld [vmem:[%s271 + $0x78] sm:$0xff]
        %v401 = vld [vmem:[%s271 + $0x80] sm:$0xff]
        %v402 = vld [vmem:[%s271 + $0x88] sm:$0xff]
        %v403 = vld [vmem:[%s271 + $0x90] sm:$0xff]
        %v404 = vld [vmem:[%s271 + $0x98] sm:$0xff]
        %v405 = vld [vmem:[%s271 + $0xa0] sm:$0xff]
        %v406 = vld [vmem:[%s271 + $0xa8] sm:$0xff]
        %v407 = vld [vmem:[%s271 + $0xb0] sm:$0xff]
        %v408 = vld [vmem:[%s271 + $0xb8] sm:$0xff]
        %v409 = vld [vmem:[%s271 + $0xc0] sm:$0xff]
        %v410 = vld [vmem:[%s271 + $0xc8] sm:$0xff]
        %v411 = vld [vmem:[%s271 + $0xd0] sm:$0xff]
        %v412 = vld [vmem:[%s271 + $0xd8] sm:$0xff]
        %v413 = vld [vmem:[%s271 + $0xe0] sm:$0xff]
        %v414 = vld [vmem:[%s271 + $0xe8] sm:$0xff]
        %v415 = vld [vmem:[%s271 + $0xf0] sm:$0xff]
        %v416 = vld [vmem:[%s271 + $0xf8] sm:$0xff]
        %v417 = vld [vmem:[%s271 + $0x100] sm:$0xff]
        %v418 = vld [vmem:[%s271 + $0x108] sm:$0xff]
        %v419 = vld [vmem:[%s271 + $0x110] sm:$0xff]
        %v420 = vld [vmem:[%s271 + $0x118] sm:$0xff]
        %v421 = vld [vmem:[%s271 + $0x120] sm:$0xff]
        %v422 = vld [vmem:[%s271 + $0x128] sm:$0xff]
        %v423 = vld [vmem:[%s271 + $0x130] sm:$0xff]
        %v424 = vld [vmem:[%s271 + $0x138] sm:$0xff]
        %v425 = vld [vmem:[%s271 + $0x140] sm:$0xff]
        %v426 = vld [vmem:[%s271 + $0x148] sm:$0xff]
        %v427 = vld [vmem:[%s271 + $0x150] sm:$0xff]
        %v428 = vld [vmem:[%s271 + $0x158] sm:$0xff]
        %v429 = vld [vmem:[%s271 + $0x160] sm:$0xff]
        %v430 = vld [vmem:[%s271 + $0x168] sm:$0xff]
        %v431 = vld [vmem:[%s271 + $0x170] sm:$0xff]
        %v432 = vld [vmem:[%s271 + $0x178] sm:$0xff]
        %v433 = vld [vmem:[%s271 + $0x180] sm:$0xff]
        %v434 = vld [vmem:[%s271 + $0x188] sm:$0xff]
        %v435 = vld [vmem:[%s271 + $0x190] sm:$0xff]
        %v436 = vld [vmem:[%s271 + $0x198] sm:$0xff]
        %v437 = vld [vmem:[%s271 + $0x1a0] sm:$0xff]
        %v438 = vld [vmem:[%s271 + $0x1a8] sm:$0xff]
        %v439 = vld [vmem:[%s271 + $0x1b0] sm:$0xff]
        %v440 = vld [vmem:[%s271 + $0x1b8] sm:$0xff]
        %v441 = vld [vmem:[%s271 + $0x1c0] sm:$0xff]
        %v442 = vld [vmem:[%s271 + $0x1c8] sm:$0xff]
        %v443 = vld [vmem:[%s271 + $0x1d0] sm:$0xff]
        %v444 = vld [vmem:[%s271 + $0x1d8] sm:$0xff]
        %v445 = vld [vmem:[%s271 + $0x1e0] sm:$0xff]
        %v446 = vld [vmem:[%s271 + $0x1e8] sm:$0xff]
        %v447 = vld [vmem:[%s271 + $0x1f0] sm:$0xff]
        %v448 = vld [vmem:[%s271 + $0x1f8] sm:$0xff]
        %449 = vmatpush.xpose.msra.mxu0 %v336
        %450 = vmatpush.xpose.msra.mxu0 %v335
        %451 = vmatpush.xpose.msra.mxu0 %v334
        %452 = vmatpush.xpose.msra.mxu0 %v333
        %453 = vmatpush.xpose.msra.mxu0 %v332
        %454 = vmatpush.xpose.msra.mxu0 %v331
        %455 = vmatpush.xpose.msra.mxu0 %v330
        %456 = vmatpush.xpose.msra.mxu0 %v329
        %457 = vmatpush.xpose.msra.mxu0 %v328
        %458 = vmatpush.xpose.msra.mxu0 %v327
        %459 = vmatpush.xpose.msra.mxu0 %v326
        %460 = vmatpush.xpose.msra.mxu0 %v325
        %461 = vmatpush.xpose.msra.mxu0 %v324
        %462 = vmatpush.xpose.msra.mxu0 %v323
        %463 = vmatpush.xpose.msra.mxu0 %v322
        %464 = vmatpush.xpose.msra.mxu0 %v321
        %465 = vmatmul.f32.gmra.mxu0 %v317
        %v466 = vpop.f32.mrf.mxu0
        %v467 = vadd.f32 0.0, %v466
        %468 = vdwg.mxu0
        %469 = vmatpush.xpose.msra.mxu0 %v352
        %470 = vmatpush.xpose.msra.mxu0 %v351
        %471 = vmatpush.xpose.msra.mxu0 %v350
        %472 = vmatpush.xpose.msra.mxu0 %v349
        %473 = vmatpush.xpose.msra.mxu0 %v348
        %474 = vmatpush.xpose.msra.mxu0 %v347
        %475 = vmatpush.xpose.msra.mxu0 %v346
        %476 = vmatpush.xpose.msra.mxu0 %v345
        %477 = vmatpush.xpose.msra.mxu0 %v344
        %478 = vmatpush.xpose.msra.mxu0 %v343
        %479 = vmatpush.xpose.msra.mxu0 %v342
        %480 = vmatpush.xpose.msra.mxu0 %v341
        %481 = vmatpush.xpose.msra.mxu0 %v340
        %482 = vmatpush.xpose.msra.mxu0 %v339
        %483 = vmatpush.xpose.msra.mxu0 %v338
        %484 = vmatpush.xpose.msra.mxu0 %v337
        %485 = vmatmul.f32.gmra.mxu0 %v318
        %v486 = vpop.f32.mrf.mxu0
        %v487 = vadd.f32 0.0, %v486
        %488 = vdwg.mxu0
        %489 = vmatpush.xpose.msra.mxu0 %v368
        %490 = vmatpush.xpose.msra.mxu0 %v367
        %491 = vmatpush.xpose.msra.mxu0 %v366
        %492 = vmatpush.xpose.msra.mxu0 %v365
        %493 = vmatpush.xpose.msra.mxu0 %v364
        %494 = vmatpush.xpose.msra.mxu0 %v363
        %495 = vmatpush.xpose.msra.mxu0 %v362
        %496 = vmatpush.xpose.msra.mxu0 %v361
        %497 = vmatpush.xpose.msra.mxu0 %v360
        %498 = vmatpush.xpose.msra.mxu0 %v359
        %499 = vmatpush.xpose.msra.mxu0 %v358
        %500 = vmatpush.xpose.msra.mxu0 %v357
        %501 = vmatpush.xpose.msra.mxu0 %v356
        %502 = vmatpush.xpose.msra.mxu0 %v355
        %503 = vmatpush.xpose.msra.mxu0 %v354
        %504 = vmatpush.xpose.msra.mxu0 %v353
        %505 = vmatmul.f32.gmra.mxu0 %v319
        %v506 = vpop.f32.mrf.mxu0
        %v507 = vadd.f32 0.0, %v506
        %508 = vdwg.mxu0
        %509 = vmatpush.xpose.msra.mxu0 %v384
        %510 = vmatpush.xpose.msra.mxu0 %v383
        %511 = vmatpush.xpose.msra.mxu0 %v382
        %512 = vmatpush.xpose.msra.mxu0 %v381
        %513 = vmatpush.xpose.msra.mxu0 %v380
        %514 = vmatpush.xpose.msra.mxu0 %v379
        %515 = vmatpush.xpose.msra.mxu0 %v378
        %516 = vmatpush.xpose.msra.mxu0 %v377
        %517 = vmatpush.xpose.msra.mxu0 %v376
        %518 = vmatpush.xpose.msra.mxu0 %v375
        %519 = vmatpush.xpose.msra.mxu0 %v374
        %520 = vmatpush.xpose.msra.mxu0 %v373
        %521 = vmatpush.xpose.msra.mxu0 %v372
        %522 = vmatpush.xpose.msra.mxu0 %v371
        %523 = vmatpush.xpose.msra.mxu0 %v370
        %524 = vmatpush.xpose.msra.mxu0 %v369
        %525 = vmatmul.f32.gmra.mxu0 %v320
        %v526 = vpop.f32.mrf.mxu0
        %v527 = vadd.f32 0.0, %v526
        %528 = vdwg.mxu0
        %v529 = vmul.f32 %v467, 0.25
        %v530 = vmul.f32 %v487, 0.25
        %v531 = vmul.f32 %v507, 0.25
        %v532 = vmul.f32 %v527, 0.25
        %v533 = vlaneseq
        %v534 = vand.u32 %v533, 127
        %vm535 = vcmp.lt.s32.totalorder %v534, 8
        %v536 = vsel %vm535, %v529, -1e+30
        %v537 = vsel %vm535, %v530, -1e+30
        %v538 = vsel %vm535, %v531, -1e+30
        %v539 = vsel %vm535, %v532, -1e+30
        %540 = vmax.xlane.f32.xlu0 %v536
        %v541 = vpop.xlane.xlu0 %540
        %542 = vmax.xlane.f32.xlu0 %v537
        %v543 = vpop.xlane.xlu0 %542
        %544 = vmax.xlane.f32.xlu0 %v538
        %v545 = vpop.xlane.xlu0 %544
        %546 = vmax.xlane.f32.xlu0 %v539
        %v547 = vpop.xlane.xlu0 %546
        %v548 = vsub.f32 %v536, %v541
        %v549 = vsub.f32 %v537, %v543
        %v550 = vsub.f32 %v538, %v545
        %v551 = vsub.f32 %v539, %v547
        %v552 = vmul.f32 %v548, 1.442695
        %v553 = vpow.pop %v552
        %v554 = vmul.f32 %v549, 1.442695
        %v555 = vpow.pop %v554
        %v556 = vmul.f32 %v550, 1.442695
        %v557 = vpow.pop %v556
        %v558 = vmul.f32 %v551, 1.442695
        %v559 = vpow.pop %v558
        %560 = vadd.xlane.f32.xlu0 %v553
        %v561 = vpop.xlane.xlu0 %560
        %562 = vadd.xlane.f32.xlu0 %v555
        %v563 = vpop.xlane.xlu0 %562
        %564 = vadd.xlane.f32.xlu0 %v557
        %v565 = vpop.xlane.xlu0 %564
        %566 = vadd.xlane.f32.xlu0 %v559
        %v567 = vpop.xlane.xlu0 %566
        %v568 = vrcp.pop %v561
        %v569 = vrcp.pop %v563
        %v570 = vrcp.pop %v565
        %v571 = vrcp.pop %v567
        %v572 = vmul.f32 %v553, %v568
        %v573 = vmul.f32 %v555, %v569
        %v574 = vmul.f32 %v557, %v570
        %v575 = vmul.f32 %v559, %v571
        %576 = vmax.xlane.f32.xlu0 %v572
        %v577 = vpop.xlane.xlu0 %576
        %578 = vmax.xlane.f32.xlu0 %v573
        %v579 = vpop.xlane.xlu0 %578
        %580 = vmax.xlane.f32.xlu0 %v574
        %v581 = vpop.xlane.xlu0 %580
        %582 = vmax.xlane.f32.xlu0 %v575
        %v583 = vpop.xlane.xlu0 %582
        %vm584 = vcmp.ge.f32.partialorder %v572, %v577
        %vm585 = vcmp.ge.f32.partialorder %v573, %v579
        %vm586 = vcmp.ge.f32.partialorder %v574, %v581
        %vm587 = vcmp.ge.f32.partialorder %v575, %v583
        %v588 = vsel %vm584, -1.0, %v572
        %v589 = vsel %vm585, -1.0, %v573
        %v590 = vsel %vm586, -1.0, %v574
        %v591 = vsel %vm587, -1.0, %v575
        %592 = vmax.xlane.f32.xlu0 %v588
        %v593 = vpop.xlane.xlu0 %592
        %594 = vmax.xlane.f32.xlu0 %v589
        %v595 = vpop.xlane.xlu0 %594
        %596 = vmax.xlane.f32.xlu0 %v590
        %v597 = vpop.xlane.xlu0 %596
        %598 = vmax.xlane.f32.xlu0 %v591
        %v599 = vpop.xlane.xlu0 %598
        %vm600 = vcmp.ge.f32.partialorder %v588, %v593
        %vm601 = vcmp.ge.f32.partialorder %v589, %v595
        %vm602 = vcmp.ge.f32.partialorder %v590, %v597
        %vm603 = vcmp.ge.f32.partialorder %v591, %v599
        %v604 = vsel %vm600, -1.0, %v588
        %v605 = vsel %vm601, -1.0, %v589
        %v606 = vsel %vm602, -1.0, %v590
        %v607 = vsel %vm603, -1.0, %v591
        %608 = vmax.xlane.f32.xlu0 %v604
        %v609 = vpop.xlane.xlu0 %608
        %610 = vmax.xlane.f32.xlu0 %v605
        %v611 = vpop.xlane.xlu0 %610
        %612 = vmax.xlane.f32.xlu0 %v606
        %v613 = vpop.xlane.xlu0 %612
        %614 = vmax.xlane.f32.xlu0 %v607
        %v615 = vpop.xlane.xlu0 %614
        %vm616 = vcmp.ge.f32.partialorder %v604, %v609
        %vm617 = vcmp.ge.f32.partialorder %v605, %v611
        %vm618 = vcmp.ge.f32.partialorder %v606, %v613
        %vm619 = vcmp.ge.f32.partialorder %v607, %v615
        %v620 = vsel %vm616, -1.0, %v604
        %v621 = vsel %vm617, -1.0, %v605
        %v622 = vsel %vm618, -1.0, %v606
        %v623 = vsel %vm619, -1.0, %v607
        %624 = vmax.xlane.f32.xlu0 %v620
        %v625 = vpop.xlane.xlu0 %624
        %626 = vmax.xlane.f32.xlu0 %v621
        %v627 = vpop.xlane.xlu0 %626
        %628 = vmax.xlane.f32.xlu0 %v622
        %v629 = vpop.xlane.xlu0 %628
        %630 = vmax.xlane.f32.xlu0 %v623
        %v631 = vpop.xlane.xlu0 %630
        %v632 = vadd.f32 %v625, 1e-07
        %v633 = vadd.f32 %v627, 1e-07
        %v634 = vadd.f32 %v629, 1e-07
        %v635 = vadd.f32 %v631, 1e-07
        %v636 = vsub.f32 %v572, %v632
        %v637 = vsub.f32 %v573, %v633
        %v638 = vsub.f32 %v574, %v634
        %v639 = vsub.f32 %v575, %v635
        %v640 = vmax.f32 %v636, 0.0
        %v641 = vmax.f32 %v637, 0.0
        %v642 = vmax.f32 %v638, 0.0
        %v643 = vmax.f32 %v639, 0.0
        %644 = vadd.xlane.f32.xlu0 %v640
        %v645 = vpop.xlane.xlu0 %644
        %646 = vadd.xlane.f32.xlu0 %v641
        %v647 = vpop.xlane.xlu0 %646
        %648 = vadd.xlane.f32.xlu0 %v642
        %v649 = vpop.xlane.xlu0 %648
        %650 = vadd.xlane.f32.xlu0 %v643
        %v651 = vpop.xlane.xlu0 %650
        %v652 = vadd.f32 %v645, 1e-07
        %v653 = vadd.f32 %v647, 1e-07
        %v654 = vadd.f32 %v649, 1e-07
        %v655 = vadd.f32 %v651, 1e-07
        %v656 = vrcp.pop %v652
        %v657 = vrcp.pop %v653
        %v658 = vrcp.pop %v654
        %v659 = vrcp.pop %v655
        %v660 = vmul.f32 %v640, %v656
        %v661 = vmul.f32 %v641, %v657
        %v662 = vmul.f32 %v642, %v658
        %v663 = vmul.f32 %v643, %v659
        %664 = vst [vmem:[%s311] sm:$0xff] %v660
        %665 = vst [vmem:[%s311 + $0x8] sm:$0xff] %v661
        %666 = vst [vmem:[%s311 + $0x10] sm:$0xff] %v662
        %667 = vst [vmem:[%s311 + $0x18] sm:$0xff] %v663
        %668 = vmatpush.msra.mxu0 %v400
        %669 = vmatpush.msra.mxu0 %v399
        %670 = vmatpush.msra.mxu0 %v398
        %671 = vmatpush.msra.mxu0 %v397
        %672 = vmatpush.msra.mxu0 %v396
        %673 = vmatpush.msra.mxu0 %v395
        %674 = vmatpush.msra.mxu0 %v394
        %675 = vmatpush.msra.mxu0 %v393
        %676 = vmatpush.msra.mxu0 %v392
        %677 = vmatpush.msra.mxu0 %v391
        %678 = vmatpush.msra.mxu0 %v390
        %679 = vmatpush.msra.mxu0 %v389
        %680 = vmatpush.msra.mxu0 %v388
        %681 = vmatpush.msra.mxu0 %v387
        %682 = vmatpush.msra.mxu0 %v386
        %683 = vmatpush.msra.mxu0 %v385
        %684 = vmatmul.f32.gmra.mxu0 %v660
        %v685 = vpop.f32.mrf.mxu0
        %v686 = vadd.f32 0.0, %v685
        %687 = vdwg.mxu0
        %688 = vmatpush.msra.mxu0 %v416
        %689 = vmatpush.msra.mxu0 %v415
        %690 = vmatpush.msra.mxu0 %v414
        %691 = vmatpush.msra.mxu0 %v413
        %692 = vmatpush.msra.mxu0 %v412
        %693 = vmatpush.msra.mxu0 %v411
        %694 = vmatpush.msra.mxu0 %v410
        %695 = vmatpush.msra.mxu0 %v409
        %696 = vmatpush.msra.mxu0 %v408
        %697 = vmatpush.msra.mxu0 %v407
        %698 = vmatpush.msra.mxu0 %v406
        %699 = vmatpush.msra.mxu0 %v405
        %700 = vmatpush.msra.mxu0 %v404
        %701 = vmatpush.msra.mxu0 %v403
        %702 = vmatpush.msra.mxu0 %v402
        %703 = vmatpush.msra.mxu0 %v401
        %704 = vmatmul.f32.gmra.mxu0 %v661
        %v705 = vpop.f32.mrf.mxu0
        %v706 = vadd.f32 0.0, %v705
        %707 = vdwg.mxu0
        %708 = vmatpush.msra.mxu0 %v432
        %709 = vmatpush.msra.mxu0 %v431
        %710 = vmatpush.msra.mxu0 %v430
        %711 = vmatpush.msra.mxu0 %v429
        %712 = vmatpush.msra.mxu0 %v428
        %713 = vmatpush.msra.mxu0 %v427
        %714 = vmatpush.msra.mxu0 %v426
        %715 = vmatpush.msra.mxu0 %v425
        %716 = vmatpush.msra.mxu0 %v424
        %717 = vmatpush.msra.mxu0 %v423
        %718 = vmatpush.msra.mxu0 %v422
        %719 = vmatpush.msra.mxu0 %v421
        %720 = vmatpush.msra.mxu0 %v420
        %721 = vmatpush.msra.mxu0 %v419
        %722 = vmatpush.msra.mxu0 %v418
        %723 = vmatpush.msra.mxu0 %v417
        %724 = vmatmul.f32.gmra.mxu0 %v662
        %v725 = vpop.f32.mrf.mxu0
        %v726 = vadd.f32 0.0, %v725
        %727 = vdwg.mxu0
        %728 = vmatpush.msra.mxu0 %v448
        %729 = vmatpush.msra.mxu0 %v447
        %730 = vmatpush.msra.mxu0 %v446
        %731 = vmatpush.msra.mxu0 %v445
        %732 = vmatpush.msra.mxu0 %v444
        %733 = vmatpush.msra.mxu0 %v443
        %734 = vmatpush.msra.mxu0 %v442
        %735 = vmatpush.msra.mxu0 %v441
        %736 = vmatpush.msra.mxu0 %v440
        %737 = vmatpush.msra.mxu0 %v439
        %738 = vmatpush.msra.mxu0 %v438
        %739 = vmatpush.msra.mxu0 %v437
        %740 = vmatpush.msra.mxu0 %v436
        %741 = vmatpush.msra.mxu0 %v435
        %742 = vmatpush.msra.mxu0 %v434
        %743 = vmatpush.msra.mxu0 %v433
        %744 = vmatmul.f32.gmra.mxu0 %v663
        %v745 = vpop.f32.mrf.mxu0
        %v746 = vadd.f32 0.0, %v745
        %747 = vdwg.mxu0
        %748 = vst [vmem:[%s304] sm:$0xff] %v686
        %749 = vst [vmem:[%s304 + $0x8] sm:$0xff] %v706
        %750 = vst [vmem:[%s304 + $0x10] sm:$0xff] %v726
        %751 = vst [vmem:[%s304 + $0x18] sm:$0xff] %v746
        %s752 = sand.u32 %s114, 1
        %s753 = scalar_lea.sflag [#allocation4], %s752
        %s754 = sand.u32 %s114, 1
        %s755 = smul.addr %s754, 32
        %s756 = scalar_lea.vmem [#allocation8], %s755
        %s757 = sand.u32 %s140, 1
        %s758 = scalar_lea.sflag [#allocation10], %s757
        %s759 = sand.u32 %s140, 1
        %s760 = smul.addr %s759, 32
        %s761 = scalar_lea.vmem [#allocation9], %s760
        // Predicated region
        $region45: #{tpu_custom_call.1} parent=31 // pred_check
          %p762 = pneg %p124
        $region46: #{tpu_custom_call.1} parent=31 // pred_check_branch
          %764 = sbr.rel (%p762) target = $region48
        $region47: #{tpu_custom_call.1} parent=31 // pred_region
          %s765 = smul.u32 4, %s28
          %767 = vsyncadd %s753, 0
          %s768 = smul.addr %s765, 8
          %s769 = scalar_lea.hbm %s3, %s768
          %s770 = sshll.u32 %s756, 4
          %s771 = int_to_ptr.vmem [resolvable:$true] %s770
          %s772 = sshll.u32 %s769, 4
          %s773 = int_to_ptr.hbm [resolvable:$true] %s772
          %778 = dma.vmem_to_hbm [thread:$0]  %s771, 512, %s773, %s753, 128, 128, 8
        $region48: #{tpu_custom_call.1} parent=31 // pred_fallthru
          _
        // Predicated region
        $region49: #{tpu_custom_call.1} parent=31 // pred_check
          %p779 = pneg %p150
        $region50: #{tpu_custom_call.1} parent=31 // pred_check_branch
          %781 = sbr.rel (%p779) target = $region52
        $region51: #{tpu_custom_call.1} parent=31 // pred_region
          %s782 = smul.u32 4, %s28
          %784 = vsyncadd %s758, 0
          %s785 = smul.addr %s782, 8
          %s786 = scalar_lea.hbm %s4, %s785
          %s787 = sshll.u32 %s761, 4
          %s788 = int_to_ptr.vmem [resolvable:$true] %s787
          %s789 = sshll.u32 %s786, 4
          %s790 = int_to_ptr.hbm [resolvable:$true] %s789
          %795 = dma.vmem_to_hbm [thread:$0]  %s788, 512, %s790, %s758, 128, 128, 8
        $region52: #{tpu_custom_call.1} parent=31 // pred_fallthru
          _
      $region32: #{tpu_custom_call.1} parent=5 // pred_fallthru
        _
      %p796 = scmp.le.s32.totalorder 2, %s23
      // Predicated region
      $region53: #{tpu_custom_call.1} parent=5 // pred_check
        %p797 = pneg %p796
      $region54: #{tpu_custom_call.1} parent=5 // pred_check_branch
        %799 = sbr.rel (%p797) target = $region56
      $region55: #{tpu_custom_call.1} parent=5 // pred_region
        %s800 = ssub.s32 %s23, 2
        // Predicated region
        $region57: #{tpu_custom_call.1} parent=55 // pred_check
          %p801 = pneg %p130
        $region58: #{tpu_custom_call.1} parent=55 // pred_check_branch
          %803 = sbr.rel (%p801) target = $region60
        $region59: #{tpu_custom_call.1} parent=55 // pred_region
          %s804 = sand.u32 %s115, 1
          %s805 = scalar_lea.sflag [#allocation4], %s804
          %s806 = sand.u32 %s115, 1
          %s807 = smul.addr %s806, 32
          %s808 = scalar_lea.vmem [#allocation8], %s807
          %810 = dma.done %s805, 512
        $region60: #{tpu_custom_call.1} parent=55 // pred_fallthru
          _
        // Predicated region
        $region61: #{tpu_custom_call.1} parent=55 // pred_check
          %p811 = pneg %p156
        $region62: #{tpu_custom_call.1} parent=55 // pred_check_branch
          %813 = sbr.rel (%p811) target = $region64
        $region63: #{tpu_custom_call.1} parent=55 // pred_region
          %s814 = sand.u32 %s141, 1
          %s815 = scalar_lea.sflag [#allocation10], %s814
          %s816 = sand.u32 %s141, 1
          %s817 = smul.addr %s816, 32
          %s818 = scalar_lea.vmem [#allocation9], %s817
          %820 = dma.done %s815, 512
        $region64: #{tpu_custom_call.1} parent=55 // pred_fallthru
          _
      $region56: #{tpu_custom_call.1} parent=5 // pred_fallthru
        _
    $region6: #{tpu_custom_call.1} parent=1 // loop_footer
      %s27 = sadd.s32 1, %s23
    $region7: #{tpu_custom_call.1} parent=1 // loop_footer_branch
      %22 = sbr.rel target = $region3
    $region8: #{tpu_custom_call.1} parent=1 // loop_exit
      _
    %821 = vsyncpa [#allocation3], 1
    %s822 = scalar_lea.sflag [#allocation3], 1
    %823 = vsyncpa %s822, 1
    %824 = vsyncpa [#allocation6], 1
    %s825 = scalar_lea.sflag [#allocation6], 1
    %826 = vsyncpa %s825, 1
    %827 = vsyncpa [#allocation4], 1
    %s828 = scalar_lea.sflag [#allocation4], 1
    %829 = vsyncpa %s828, 1
    %830 = vsyncpa [#allocation10], 1
    %s831 = scalar_lea.sflag [#allocation10], 1
    %832 = vsyncpa %s831, 1

</llo_original>
